<compile_context>
chip_gen: v6e
topology: v6e:2x2x1
jax: 0.10.0
libtpu: 0.0.40
codegen_flags: <defaults>
</compile_context>

<pallas_src>
import jax
import jax.numpy as jnp
from jax import lax
from jax.experimental import pallas as pl
from jax.experimental.pallas import tpu as pltpu

_SUBLANE = 8
_LANE = 128


def _round_up(x, m):
    return ((x + m - 1) // m) * m


def _device_kind():
    try:
        return jax.devices()[0].device_kind.lower()
    except Exception:
        return ""


def _vmem_budget():
    """(double-buffered working-set budget, vmem_limit_bytes) per TPU generation."""
    if "v7" in _device_kind():
        # v7x: 64 MiB physical VMEM per TensorCore -> keep the double-buffered
        # working set ~24-28 MiB so 2-deep pipelining stays intact.
        return 26 * 1024 * 1024, 48 * 1024 * 1024
    # v5e / v6e: 128 MiB physical VMEM.
    return 48 * 1024 * 1024, 80 * 1024 * 1024


def _tile_caps():
    if "v7" in _device_kind():
        return 512, 1024        # (tn cap, tm cap)
    return 1024, 2048


def _largest_aligned_divisor(n, align, cap):
    """Largest multiple of `align` dividing `n` (n itself a multiple of `align`), <= cap."""
    best = align
    d = align
    while d <= min(n, cap):
        if n % d == 0:
            best = d
        d += align
    return best


# ---------------------------------------------------------------------------
# Kernel 1: tiled matmul + bias,  o = a @ w^T + b  (weight kept in PyTorch (M, K)
# layout; the transpose folds into the MXU contraction).  Fully parallel grid.
# ---------------------------------------------------------------------------
def _matmul_bias_kernel(a_ref, w_ref, b_ref, o_ref):
    o_ref[...] = (
        lax.dot_general(
            a_ref[...], w_ref[...],
            dimension_numbers=(((1,), (1,)), ((), ())),
            preferred_element_type=jnp.float32,
        )
        + b_ref[...]
    )


def _matmul_bias(a, w, b, *, compute_dtype=jnp.bfloat16):
    """out = a @ w^T + b.   a: (N, K), w: (M, K), b: (1, M)  ->  (N, M) float32.

    Operands are cast to `compute_dtype` (bf16 by default) with f32 accumulation.
    Grid is (M-tiles, N-tiles) so the weight block is resident across the inner axis:
    the full (M, K) weight streams from HBM once; only the (N, K) rows re-stream.
    """
    N, K = a.shape
    M = w.shape[0]

    tile_budget, vmem_limit = _vmem_budget()
    tn_cap, tm_cap = _tile_caps()
    in_bytes = jnp.dtype(compute_dtype).itemsize

    # Row tiling: pad rows (cheap, activation-sized) to an aligned size, largest divisor.
    Np = _round_up(N, 256) if N >= 256 else _round_up(N, _SUBLANE)
    tn = _largest_aligned_divisor(Np, _SUBLANE, tn_cap)
    # Column tiling: only pad the (potentially huge) weight to the next lane multiple.
    Mp = _round_up(M, _LANE)
    tm = _largest_aligned_divisor(Mp, _LANE, tm_cap)

    # Shrink tiles until the double-buffered working set fits the per-generation budget.
    # TODO(synk): tile K with a reduction grid axis if E/H ever exceed a few thousand.
    def _working_set(tn_, tm_):
        return 2 * (tn_ * K * in_bytes + tm_ * K * in_bytes + tm_ * 4 + tn_ * tm_ * 4)

    for _ in range(32):
        if _working_set(tn, tm) <= tile_budget:
            break
        if tn > _SUBLANE and (tn >= tm or tm <= _LANE):
            tn = _largest_aligned_divisor(Np, _SUBLANE, max(_SUBLANE, tn // 2))
        elif tm > _LANE:
            tm = _largest_aligned_divisor(Mp, _LANE, max(_LANE, tm // 2))
        else:
            break

    a_p = jnp.pad(a, ((0, Np - N), (0, 0))) if Np != N else a
    w_p = jnp.pad(w, ((0, Mp - M), (0, 0))) if Mp != M else w
    b_p = jnp.pad(b, ((0, 0), (0, Mp - M))) if Mp != M else b

    a_p = a_p.astype(compute_dtype)
    w_p = w_p.astype(compute_dtype)
    b_p = b_p.astype(jnp.float32)

    out = pl.pallas_call(
        _matmul_bias_kernel,
        out_shape=jax.ShapeDtypeStruct((Np, Mp), jnp.float32),
        grid_spec=pltpu.PrefetchScalarGridSpec(
            num_scalar_prefetch=0,
            grid=(Mp // tm, Np // tn),            # weight tile outer -> resident on inner axis
            in_specs=[
                pl.BlockSpec((tn, K), lambda j, i: (i, 0)),   # activations (stream)
                pl.BlockSpec((tm, K), lambda j, i: (j, 0)),   # weight (resident across inner axis)
                pl.BlockSpec((1, tm), lambda j, i: (0, j)),   # bias   (resident across inner axis)
            ],
            out_specs=pl.BlockSpec((tn, tm), lambda j, i: (i, j)),
        ),
        compiler_params=pltpu.CompilerParams(
            dimension_semantics=("parallel", "parallel"),
            vmem_limit_bytes=vmem_limit,
        ),
    )(a_p, w_p, b_p)

    if Np != N or Mp != M:
        out = out[:N, :M]
    return out


# ---------------------------------------------------------------------------
# Kernel 2: sequential tanh-RNN recurrence over one chunk of timesteps.
#   u_ref   : (C, Bs, H)  time-major precomputed e @ W_ih^T + (b_ih + b_hh)
#   h0_ref  : (Bs, H)     initial hidden state for this batch split
#   whh_ref : (H, H)      W_hh (PyTorch layout; contracted on its last dim)
#   o_ref   : (Bs, C, H)  hidden states, written directly batch-major (no XLA transpose)
#   hn_ref  : (Bs, H)     resident carried hidden state (final value = h_T)
# ---------------------------------------------------------------------------
def _rnn_recurrence_kernel(u_ref, h0_ref, whh_ref, o_ref, hn_ref):
    c = pl.program_id(1)                      # axis 0 = batch split, axis 1 = time chunk

    @pl.when(c == 0)
    def _():
        hn_ref[...] = h0_ref[...]

    chunk = u_ref.shape[0]                    # static

    def step(i, h):
        h_new = jnp.tanh(
            u_ref[i]
            + lax.dot_general(                # h @ W_hh^T without materializing W_hh^T
                h, whh_ref[...],
                dimension_numbers=(((1,), (1,)), ((), ())),
                preferred_element_type=jnp.float32,
            )
        )
        o_ref[:, pl.ds(i, 1), :] = h_new[:, None, :]
        return h_new

    # Partial unroll: enough LLO visibility to overlap u loads / o stores with the
    # serial MXU chain without blowing instruction/vreg budget for large chunks.
    hn_ref[...] = lax.fori_loop(0, chunk, step, hn_ref[...], unroll=min(8, chunk))


def _pick_time_chunk(T, Bs, Hp, budget):
    # Batch-major output block is (Bs, chunk, Hp): chunk must be a multiple of 8
    # (sublane dim) or equal to the full T.  Keep the double-buffered u/o chunks
    # within the VMEM budget.
    cap = min(T, 128)
    c = (cap // _SUBLANE) * _SUBLANE
    while c >= _SUBLANE:
        if T % c == 0 and 16 * c * Bs * Hp + 8 * Hp * Hp <= budget:
            return c
        c -= _SUBLANE
    return T   # oddly-factored / tiny T: single chunk


def rnn_word2vec_forward(x, h0, params, *, time_chunk=None):
    """x: (B, T) int32 token ids; h0: (1, B, H) float32.
    Returns (logits (B, T, V), hn (1, B, H)) matching the PyTorch module."""
    embed_table = params["embed"]      # (V, E)
    w_ih = params["w_ih"]              # (H, E)  -- PyTorch weight_ih_l0
    w_hh = params["w_hh"]              # (H, H)  -- PyTorch weight_hh_l0
    b_ih = params["b_ih"]              # (H,)
    b_hh = params["b_hh"]              # (H,)
    w_out = params["w_out"]            # (V, H)  -- PyTorch Linear weight
    b_out = params["b_out"]            # (V,)

    B, T = x.shape
    V, E = embed_table.shape
    H = w_ih.shape[0]

    # --- Alignment padding (zero padding is exact: padded hidden/embed columns stay
    #     exactly tanh(0)=0 through the recurrence; padded batch rows are sliced off). ---
    Bp = _round_up(max(B, _SUBLANE), _SUBLANE)
    Hp = _round_up(H, _LANE)
    Ep = _round_up(E, _LANE)
    pad_b, pad_h, pad_e = Bp - B, Hp - H, Ep - E

    if pad_b:
        x = jnp.pad(x, ((0, pad_b), (0, 0)))
    if pad_b or pad_h:
        h0 = jnp.pad(h0, ((0, 0), (0, pad_b), (0, pad_h)))
    if pad_h or pad_e:
        w_ih = jnp.pad(w_ih, ((0, pad_h), (0, pad_e)))
    if pad_h:
        w_hh = jnp.pad(w_hh, ((0, pad_h), (0, pad_h)))
        b_ih = jnp.pad(b_ih, ((0, pad_h),))
        b_hh = jnp.pad(b_hh, ((0, pad_h),))
        w_out = jnp.pad(w_out, ((0, 0), (0, pad_h)))
    if pad_e:
        embed_table = jnp.pad(embed_table, ((0, 0), (0, pad_e)))

    tile_budget, vmem_limit = _vmem_budget()

    # --- Input projection hoisted out of the recurrence (bf16 MXU, f32 accumulate). ---
    b_fused = (b_ih + b_hh).reshape(1, Hp)
    if T * Bp >= V:
        # Fold the projection into the embedding: project the table once, gather rows.
        table_u = _matmul_bias(embed_table, w_ih, b_fused)            # (V, Hp) f32
        u_tm = table_u[x.T]                                           # (T, Bp, Hp)
    else:
        e_tm = embed_table[x.T]                                       # (T, Bp, Ep)
        u_tm = _matmul_bias(e_tm.reshape(T * Bp, Ep), w_ih, b_fused).reshape(T, Bp, Hp)

    # --- Batch-split grid axis: uses v7x's 2nd TensorCore when the batch allows it. ---
    nb = 2 if ("v7" in _device_kind() and Bp % 16 == 0 and Bp // 2 >= _SUBLANE) else 1
    Bs = Bp // nb

    if time_chunk is None:
        time_chunk = _pick_time_chunk(T, Bs, Hp, tile_budget)
    assert T % time_chunk == 0

    h_bf, hn = pl.pallas_call(
        _rnn_recurrence_kernel,
        out_shape=(
            jax.ShapeDtypeStruct((Bp, T, Hp), jnp.float32),   # batch-major hidden states
            jax.ShapeDtypeStruct((Bp, Hp), jnp.float32),      # final hidden state
        ),
        grid_spec=pltpu.PrefetchScalarGridSpec(
            num_scalar_prefetch=0,
            grid=(nb, T // time_chunk),
            in_specs=[
                pl.BlockSpec((time_chunk, Bs, Hp), lambda s, c: (c, s, 0)),  # u chunk
                pl.BlockSpec((Bs, Hp), lambda s, c: (s, 0)),                 # h0
                pl.BlockSpec((Hp, Hp), lambda s, c: (0, 0)),                 # W_hh
            ],
            out_specs=[
                pl.BlockSpec((Bs, time_chunk, Hp), lambda s, c: (s, c, 0)),  # batch-major h
                pl.BlockSpec((Bs, Hp), lambda s, c: (s, 0)),                 # hn (resident carry)
            ],
        ),
        compiler_params=pltpu.CompilerParams(
            dimension_semantics=("parallel", "arbitrary"),
            vmem_limit_bytes=vmem_limit,
        ),
    )(u_tm, h0[0], w_hh)

    # --- Output projection: batch-first, lane-dense (B*T, V) directly (no transpose). ---
    logits = _matmul_bias(h_bf.reshape(Bp * T, Hp), w_out, b_out.reshape(1, V))
    logits = logits.reshape(Bp, T, V)[:B]
    return logits, hn[:B, :H][None, :, :]


def _reference_forward(x, h0, params):
    """Pure-JAX f32 reference mirroring the PyTorch module semantics."""
    e = params["embed"][x]                                   # (B, T, E)
    w_ih, w_hh = params["w_ih"], params["w_hh"]
    b_ih, b_hh = params["b_ih"], params["b_hh"]

    def step(h, e_t):                                        # e_t: (B, E)
        h_new = jnp.tanh(e_t @ w_ih.T + b_ih + h @ w_hh.T + b_hh)
        return h_new, h_new

    hT, o_tm = lax.scan(step, h0[0], jnp.transpose(e, (1, 0, 2)))
    o = jnp.transpose(o_tm, (1, 0, 2))                       # (B, T, H)
    logits = o @ params["w_out"].T + params["b_out"]
    return logits, hT[None, :, :]


if __name__ == "__main__":
    key = jax.random.PRNGKey(0)

    def make_case(k, vocab, embed, hidden, batch, seq):
        ks = jax.random.split(k, 9)
        params = {
            "embed": jax.random.normal(ks[0], (vocab, embed), jnp.float32) * 0.1,
            "w_ih":  jax.random.normal(ks[1], (hidden, embed), jnp.float32) * 0.1,
            "w_hh":  jax.random.normal(ks[2], (hidden, hidden), jnp.float32) * 0.1,
            "b_ih":  jax.random.normal(ks[3], (hidden,), jnp.float32) * 0.1,
            "b_hh":  jax.random.normal(ks[4], (hidden,), jnp.float32) * 0.1,
            "w_out": jax.random.normal(ks[5], (vocab, hidden), jnp.float32) * 0.1,
            "b_out": jax.random.normal(ks[6], (vocab,), jnp.float32) * 0.1,
        }
        x = jax.random.randint(ks[7], (batch, seq), 0, vocab, dtype=jnp.int32)
        h0 = jax.random.normal(ks[8], (1, batch, hidden), jnp.float32)
        return params, x, h0

    k1, k2 = jax.random.split(key)
    cases = [
        (k1, 64, 32, 32, 2, 8),     # projected-table path (T*B >= V)
        (k2, 300, 48, 40, 4, 12),   # gather-then-project path, odd (non-aligned) dims
    ]
    for kc, vocab, embed, hidden, batch, seq in cases:
        params, x, h0 = make_case(kc, vocab, embed, hidden, batch, seq)
        logits, hn = jax.block_until_ready(rnn_word2vec_forward(x, h0, params))
        ref_logits, ref_hn = _reference_forward(x, h0, params)
        assert logits.shape == (batch, seq, vocab) and hn.shape == (1, batch, hidden)
        # bf16 MXU operands on the hoisted projections -> ~1e-3 abs error; recurrence is f32.
        assert jnp.allclose(logits, ref_logits, atol=2e-2, rtol=2e-2), float(
            jnp.max(jnp.abs(logits - ref_logits)))
        assert jnp.allclose(hn, ref_hn, atol=2e-2, rtol=2e-2), float(
            jnp.max(jnp.abs(hn - ref_hn)))

    print("KERNEL_OK")
</pallas_src>

<mosaic_0001>
module attributes {stable_mosaic.version = 11 : i64} {
  func.func @_matmul_bias_kernel(%arg0: i32, %arg1: i32, %arg2: memref<64x128xbf16, #tpu.memory_space<vmem>>, %arg3: memref<128x128xbf16, #tpu.memory_space<vmem>>, %arg4: memref<1x128xf32, #tpu.memory_space<vmem>>, %arg5: memref<64x128xf32, #tpu.memory_space<vmem>>) attributes {dimension_semantics = [#tpu.dimension_semantics<parallel>, #tpu.dimension_semantics<parallel>], iteration_bounds = array<i64: 1, 1>, scalar_prefetch = 0 : i64, scratch_operands = 0 : i64, tpu.core_type = #tpu.core_type<tc>, window_params = [{transform_indices = @transform_0, window_bounds = array<i64: 64, 128>}, {transform_indices = @transform_1, window_bounds = array<i64: 128, 128>}, {transform_indices = @transform_2, window_bounds = array<i64: 1, 128>}, {transform_indices = @transform_3, window_bounds = array<i64: 64, 128>}]} {
    %c0 = arith.constant 0 : index
    %c0_0 = arith.constant 0 : index
    %0 = vector.load %arg2[%c0, %c0_0] : memref<64x128xbf16, #tpu.memory_space<vmem>>, vector<64x128xbf16>
    %c0_1 = arith.constant 0 : index
    %c0_2 = arith.constant 0 : index
    %1 = vector.load %arg3[%c0_1, %c0_2] : memref<128x128xbf16, #tpu.memory_space<vmem>>, vector<128x128xbf16>
    %cst = arith.constant dense<0.000000e+00> : vector<64x128xf32>
    %2 = tpu.matmul %0, %1, %cst {dimension_numbers = #tpu.dot_dimension_numbers<[1], [1], [0], [0], [0, 0, 1, 0], [], []>} : vector<64x128xbf16>, vector<128x128xbf16>, vector<64x128xf32> -> vector<64x128xf32>
    %c0_3 = arith.constant 0 : index
    %c0_4 = arith.constant 0 : index
    %3 = vector.load %arg4[%c0_3, %c0_4] : memref<1x128xf32, #tpu.memory_space<vmem>>, vector<1x128xf32>
    %4 = vector.broadcast %3 : vector<1x128xf32> to vector<64x128xf32>
    %5 = arith.addf %2, %4 : vector<64x128xf32>
    %c0_5 = arith.constant 0 : index
    %c0_6 = arith.constant 0 : index
    %6 = vector.load %arg5[%c0_5, %c0_6] : memref<64x128xf32, #tpu.memory_space<vmem>>, vector<64x128xf32>
    tpu.vector_store %arg5[%c0_5, %c0_6], %5 {strides = array<i32>} : memref<64x128xf32, #tpu.memory_space<vmem>>, vector<64x128xf32>,
    return
  }
  func.func @transform_0(%arg0: i32, %arg1: i32) -> (i32, i32) {
    %c0_i32 = arith.constant 0 : i32
    %c0_i32_0 = arith.constant 0 : i32
    return %arg1, %c0_i32 : i32, i32
  }
  func.func @transform_1(%arg0: i32, %arg1: i32) -> (i32, i32) {
    %c0_i32 = arith.constant 0 : i32
    %c0_i32_0 = arith.constant 0 : i32
    return %arg0, %c0_i32 : i32, i32
  }
  func.func @transform_2(%arg0: i32, %arg1: i32) -> (i32, i32) {
    %c0_i32 = arith.constant 0 : i32
    %c0_i32_0 = arith.constant 0 : i32
    return %c0_i32, %arg0 : i32, i32
  }
  func.func @transform_3(%arg0: i32, %arg1: i32) -> (i32, i32) {
    %c0_i32 = arith.constant 0 : i32
    return %arg1, %arg0 : i32, i32
  }
}

</mosaic_0001>

<llo_original>
// kernel: tpu_custom_call.1
$region0: #{tpu_custom_call.1}
  #allocation0 [shape = 'u32[]', space=smem, size = 0x4, offset = 0x4, fixed_abs, tag = 'smem constant byte address 0x4 - core index']
  #allocation1 [shape = 'u32[144,128]{1,0:T(1,128)}', space=vmem, size = 0x12000, scoped, tag = 'internal scratch']
  %s0 = inlined_call_operand.hbm [shape: bf16[64,128], index: 0, kind: input, shape index: {}]
  %s1 = inlined_call_operand.hbm [shape: bf16[128,128], index: 1, kind: input, shape index: {}]
  %s2 = inlined_call_operand.vmem [shape: f32[1,128], index: 2, kind: input, shape index: {}]
  %s3 = inlined_call_operand.hbm [shape: f32[64,128], index: 3, kind: output, shape index: {}]
  %s4 = sld [smem:[#allocation0]]
  $region30: #{tpu_custom_call.1} parent=0
    _
  %s6 = ssub.s32 1, %s4
  %s7 = scalar_select 0, %s6, %s4
  $region1: #{tpu_custom_call.1} parent=0
    #allocation2 [shape = 'u8[16384]{0}', space=vmem, size = 0x4000, scoped, tag = 'input window, operand 0, single buffered']
    #allocation3 [shape = 's32[1]{0}', space=sflag, size = 0x4, scoped, tag = 'scoped memory for tpu_custom_call.1']
    #allocation4 [shape = 's32[1]{0}', space=sflag, size = 0x4, scoped, tag = 'scoped memory for tpu_custom_call.1']
    #allocation5 [shape = 'u8[32768]{0}', space=vmem, size = 0x8000, scoped, tag = 'input window, operand 1, single buffered']
    #allocation6 [shape = 's32[1]{0}', space=sflag, size = 0x4, scoped, tag = 'scoped memory for tpu_custom_call.1']
    #allocation7 [shape = 'u8[32768]{0}', space=vmem, size = 0x8000, scoped, tag = 'output window, operand 0, single buffered']
    %8 = vsyncpa [#allocation3], 0
    %9 = vsyncpa [#allocation6], 0
    %10 = vsyncpa [#allocation4], 0
    // Predicated region
    $region2: #{tpu_custom_call.1} parent=1 // pred_check
      _
    $region3: #{tpu_custom_call.1} parent=1 // pred_check_branch
      %12 = sbr.rel (0) target = $region5
    $region4: #{tpu_custom_call.1} parent=1 // pred_region
      %s14 = ssub.s32 512, 512
      %15 = vsyncadd [#allocation3], %s14
      %s16 = sshll.u32 [#allocation2], 4
      %s17 = int_to_ptr.vmem [resolvable:$true] %s16
      %22 = dma.hbm_to_vmem [thread:$0]  %s0, 512, %s17, [#allocation3], 64, 64, 4
    $region5: #{tpu_custom_call.1} parent=1 // pred_fallthru
      _
    // Predicated region
    $region6: #{tpu_custom_call.1} parent=1 // pred_check
      _
    $region7: #{tpu_custom_call.1} parent=1 // pred_check_branch
      %24 = sbr.rel (0) target = $region9
    $region8: #{tpu_custom_call.1} parent=1 // pred_region
      %s26 = ssub.s32 1024, 1024
      %27 = vsyncadd [#allocation6], %s26
      %s28 = sshll.u32 [#allocation5], 4
      %s29 = int_to_ptr.vmem [resolvable:$true] %s28
      %34 = dma.hbm_to_vmem [thread:$0]  %s1, 1024, %s29, [#allocation6], 64, 64, 4
    $region9: #{tpu_custom_call.1} parent=1 // pred_fallthru
      _
    // Predicated region
    $region10: #{tpu_custom_call.1} parent=1 // pred_check
      _
    $region11: #{tpu_custom_call.1} parent=1 // pred_check_branch
      %36 = sbr.rel (0) target = $region13
    $region12: #{tpu_custom_call.1} parent=1 // pred_region
      _
    $region13: #{tpu_custom_call.1} parent=1 // pred_fallthru
      _
    // Predicated region
    $region14: #{tpu_custom_call.1} parent=1 // pred_check
      _
    $region15: #{tpu_custom_call.1} parent=1 // pred_check_branch
      %38 = sbr.rel (0) target = $region17
    $region16: #{tpu_custom_call.1} parent=1 // pred_region
      %39 = dma.done [#allocation3], 512
    $region17: #{tpu_custom_call.1} parent=1 // pred_fallthru
      _
    // Predicated region
    $region18: #{tpu_custom_call.1} parent=1 // pred_check
      _
    $region19: #{tpu_custom_call.1} parent=1 // pred_check_branch
      %41 = sbr.rel (0) target = $region21
    $region20: #{tpu_custom_call.1} parent=1 // pred_region
      %42 = dma.done [#allocation6], 1024
    $region21: #{tpu_custom_call.1} parent=1 // pred_fallthru
      _
    %v44 = vld [vmem:[#allocation2] sm:$0xf]
    %v45 = vld [vmem:[#allocation2 + $0x4] sm:$0xf]
    %v46 = vld [vmem:[#allocation2 + $0x8] sm:$0xf]
    %v47 = vld [vmem:[#allocation2 + $0xc] sm:$0xf]
    %v48 = vld [vmem:[#allocation2 + $0x10] sm:$0xf]
    %v49 = vld [vmem:[#allocation2 + $0x14] sm:$0xf]
    %v50 = vld [vmem:[#allocation2 + $0x18] sm:$0xf]
    %v51 = vld [vmem:[#allocation2 + $0x1c] sm:$0xf]
    %v52 = vld [vmem:[#allocation5] sm:$0xf]
    %v53 = vld [vmem:[#allocation5 + $0x4] sm:$0xf]
    %v54 = vld [vmem:[#allocation5 + $0x8] sm:$0xf]
    %v55 = vld [vmem:[#allocation5 + $0xc] sm:$0xf]
    %v56 = vld [vmem:[#allocation5 + $0x10] sm:$0xf]
    %v57 = vld [vmem:[#allocation5 + $0x14] sm:$0xf]
    %v58 = vld [vmem:[#allocation5 + $0x18] sm:$0xf]
    %v59 = vld [vmem:[#allocation5 + $0x1c] sm:$0xf]
    %v60 = vld [vmem:[#allocation5 + $0x20] sm:$0xf]
    %v61 = vld [vmem:[#allocation5 + $0x24] sm:$0xf]
    %v62 = vld [vmem:[#allocation5 + $0x28] sm:$0xf]
    %v63 = vld [vmem:[#allocation5 + $0x2c] sm:$0xf]
    %v64 = vld [vmem:[#allocation5 + $0x30] sm:$0xf]
    %v65 = vld [vmem:[#allocation5 + $0x34] sm:$0xf]
    %v66 = vld [vmem:[#allocation5 + $0x38] sm:$0xf]
    %v67 = vld [vmem:[#allocation5 + $0x3c] sm:$0xf]
    %v68 = vld [vmem:[%s2] sm:$0x1]
    %v70 = vlaneseq
    %v71 = vshrl.u32 %v70, 7
    %v72 = vsub.s32 0, %v71
    %v73 = vrot.slane %v68, %v72
    %v83 = vunpack.c.l.b16 %v44
    %v84 = vunpack.c.l.b16 %v45
    %v85 = vunpack.c.l.b16 %v46
    %v86 = vunpack.c.l.b16 %v47
    %v87 = vunpack.c.l.b16 %v48
    %v88 = vunpack.c.l.b16 %v49
    %v89 = vunpack.c.l.b16 %v50
    %v90 = vunpack.c.l.b16 %v51
    %v91 = vpack.c.b16 %v84, %v83
    %v92 = vpack.c.b16 %v86, %v85
    %v93 = vpack.c.b16 %v88, %v87
    %v94 = vpack.c.b16 %v90, %v89
    %v115 = vunpack.c.l.b16 %v52
    %v116 = vunpack.c.l.b16 %v53
    %v117 = vunpack.c.l.b16 %v54
    %v118 = vunpack.c.l.b16 %v55
    %v119 = vunpack.c.l.b16 %v56
    %v120 = vunpack.c.l.b16 %v57
    %v121 = vunpack.c.l.b16 %v58
    %v122 = vunpack.c.l.b16 %v59
    %v123 = vunpack.c.l.b16 %v60
    %v124 = vunpack.c.l.b16 %v61
    %v125 = vunpack.c.l.b16 %v62
    %v126 = vunpack.c.l.b16 %v63
    %v127 = vunpack.c.l.b16 %v64
    %v128 = vunpack.c.l.b16 %v65
    %v129 = vunpack.c.l.b16 %v66
    %v130 = vunpack.c.l.b16 %v67
    %v131 = vpack.c.b16 %v116, %v115
    %v132 = vpack.c.b16 %v118, %v117
    %v133 = vpack.c.b16 %v120, %v119
    %v134 = vpack.c.b16 %v122, %v121
    %v135 = vpack.c.b16 %v124, %v123
    %v136 = vpack.c.b16 %v126, %v125
    %v137 = vpack.c.b16 %v128, %v127
    %v138 = vpack.c.b16 %v130, %v129
    %147 = vmatprep.subr.bf16.mxu0 0
    %148 = vmatpush1.bf16.xpose.msra.mxu0 %v138
    %149 = vmatprep.subr.bf16.mxu0 0
    %150 = vmatpush1.bf16.xpose.msra.mxu0 %v137
    %151 = vmatprep.subr.bf16.mxu0 0
    %152 = vmatpush1.bf16.xpose.msra.mxu0 %v136
    %153 = vmatprep.subr.bf16.mxu0 0
    %154 = vmatpush1.bf16.xpose.msra.mxu0 %v135
    %155 = vmatprep.subr.bf16.mxu0 0
    %156 = vmatpush1.bf16.xpose.msra.mxu0 %v134
    %157 = vmatprep.subr.bf16.mxu0 0
    %158 = vmatpush1.bf16.xpose.msra.mxu0 %v133
    %159 = vmatprep.subr.bf16.mxu0 0
    %160 = vmatpush1.bf16.xpose.msra.mxu0 %v132
    %161 = vmatprep.subr.bf16.mxu0 0
    %162 = vmatpush1.bf16.xpose.msra.mxu0 %v131
    %163 = vmatprep.subr.bf16.mxu0 0
    %164 = vmatpush2.bf16.xpose.msra.mxu0 0
    %165 = vmatprep.subr.bf16.mxu0 0
    %166 = vmatpush2.bf16.xpose.msra.mxu0 0
    %167 = vmatprep.subr.bf16.mxu0 0
    %168 = vmatpush2.bf16.xpose.msra.mxu0 0
    %169 = vmatprep.subr.bf16.mxu0 0
    %170 = vmatpush2.bf16.xpose.msra.mxu0 0
    %171 = vmatprep.subr.bf16.mxu0 0
    %172 = vmatpush2.bf16.xpose.msra.mxu0 0
    %173 = vmatprep.subr.bf16.mxu0 0
    %174 = vmatpush2.bf16.xpose.msra.mxu0 0
    %175 = vmatprep.subr.bf16.mxu0 0
    %176 = vmatpush2.bf16.xpose.msra.mxu0 0
    %177 = vmatprep.subr.bf16.mxu0 0
    %178 = vmatpush2.bf16.xpose.msra.mxu0 0
    %179 = vmatprep.mubr.bf16.mxu0 0
    %180 = vmatmul.mubr.bf16.gmra.mxu0 %v91
    %v181 = vpop.f32.mrf.mxu0
    %v182 = vadd.f32 %v73, %v181
    %v183 = vpop.f32.mrf.mxu0
    %v184 = vpop.f32.mrf.mxu0
    %v185 = vadd.f32 %v73, %v184
    %v186 = vpop.f32.mrf.mxu0
    %187 = vmatprep.mubr.bf16.mxu0 0
    %188 = vmatmul.mubr.bf16.gmra.mxu0 %v92
    %v189 = vpop.f32.mrf.mxu0
    %v190 = vadd.f32 %v73, %v189
    %v191 = vpop.f32.mrf.mxu0
    %v192 = vpop.f32.mrf.mxu0
    %v193 = vadd.f32 %v73, %v192
    %v194 = vpop.f32.mrf.mxu0
    %195 = vmatprep.mubr.bf16.mxu0 0
    %196 = vmatmul.mubr.bf16.gmra.mxu0 %v93
    %v197 = vpop.f32.mrf.mxu0
    %v198 = vadd.f32 %v73, %v197
    %v199 = vpop.f32.mrf.mxu0
    %v200 = vpop.f32.mrf.mxu0
    %v201 = vadd.f32 %v73, %v200
    %v202 = vpop.f32.mrf.mxu0
    %203 = vmatprep.mubr.bf16.mxu0 0
    %204 = vmatmul.mubr.bf16.gmra.mxu0 %v94
    %v205 = vpop.f32.mrf.mxu0
    %v206 = vadd.f32 %v73, %v205
    %v207 = vpop.f32.mrf.mxu0
    %v208 = vpop.f32.mrf.mxu0
    %v209 = vadd.f32 %v73, %v208
    %v210 = vpop.f32.mrf.mxu0
    %211 = vdwg.mxu0
    %212 = vst [vmem:[#allocation7] sm:$0xff] %v182
    %213 = vst [vmem:[#allocation7 + $0x8] sm:$0xff] %v185
    %214 = vst [vmem:[#allocation7 + $0x10] sm:$0xff] %v190
    %215 = vst [vmem:[#allocation7 + $0x18] sm:$0xff] %v193
    %216 = vst [vmem:[#allocation7 + $0x20] sm:$0xff] %v198
    %217 = vst [vmem:[#allocation7 + $0x28] sm:$0xff] %v201
    %218 = vst [vmem:[#allocation7 + $0x30] sm:$0xff] %v206
    %219 = vst [vmem:[#allocation7 + $0x38] sm:$0xff] %v209
    // Predicated region
    $region22: #{tpu_custom_call.1} parent=1 // pred_check
      _
    $region23: #{tpu_custom_call.1} parent=1 // pred_check_branch
      %221 = sbr.rel (0) target = $region25
    $region24: #{tpu_custom_call.1} parent=1 // pred_region
      %s223 = ssub.s32 1024, 1024
      %224 = vsyncadd [#allocation4], %s223
      %s225 = sshll.u32 [#allocation7], 4
      %s226 = int_to_ptr.vmem [resolvable:$true] %s225
      %231 = dma.vmem_to_hbm [thread:$0]  %s226, 1024, %s3, [#allocation4], 128, 128, 8
    $region25: #{tpu_custom_call.1} parent=1 // pred_fallthru
      _
    // Predicated region
    $region26: #{tpu_custom_call.1} parent=1 // pred_check
      _
    $region27: #{tpu_custom_call.1} parent=1 // pred_check_branch
      %233 = sbr.rel (0) target = $region29
    $region28: #{tpu_custom_call.1} parent=1 // pred_region
      %234 = dma.done [#allocation4], 1024
    $region29: #{tpu_custom_call.1} parent=1 // pred_fallthru
      _
    %235 = vsyncpa [#allocation3], 1
    %236 = vsyncpa [#allocation6], 1
    %237 = vsyncpa [#allocation4], 1

</llo_original>
